<compile_context>
chip_gen: v5e
topology: v5e:2x2
jax: 0.10.0
libtpu: 0.0.40
codegen_flags: <defaults>
</compile_context>

<pallas_src>
import jax
import jax.numpy as jnp
from jax.experimental import pallas as pl
from jax.experimental.pallas import tpu as pltpu


def _round_up(x, m):
    return ((x + m - 1) // m) * m


def _recon_head_kernel(x_ref, w_ref, b_ref, o_ref):
    # x_ref: (TM, NP*D) bf16   w_ref: (NP*D, NP*P) bf16
    # b_ref: (1, NP*P)  f32    o_ref: (TM, NP*P)   out dtype
    acc = jnp.dot(x_ref[...], w_ref[...], preferred_element_type=jnp.float32)
    o_ref[...] = (acc + b_ref[...]).astype(o_ref.dtype)


@jax.jit
def reconstruction_head(hidden_features, weight, bias):
    """PatchTSMixerVAEForReconstructionHead forward (patchwise, eval mode).

    hidden_features: (B, C, NP, D) float32
    weight:          (patch_length, D)  -- PyTorch nn.Linear weight layout
    bias:            (patch_length,)
    returns:         (B, NP*patch_length, C) == (B, context_length, C)
    """
    B, C, NP, D = hidden_features.shape
    P = weight.shape[0]
    K = NP * D            # kernel reduction dim
    N = NP * P            # kernel output dim == context_length (lane-dense)
    M = B * C             # independent rows

    # TODO(synk): nn.Dropout(head_dropout) is identity in eval/inference; the
    # training-mode dropout mask is not implemented.

    # Flatten patches into the row, build block-diagonal weight so that
    # row @ w_bd == concat_over_patches(patch @ weight.T)  (== Linear+Flatten).
    x2 = hidden_features.reshape(M, K)
    w_bd = jnp.kron(jnp.eye(NP, dtype=weight.dtype), weight.T)    # (K, N)
    b_tiled = jnp.tile(bias, NP).reshape(1, N).astype(jnp.float32)

    # Narrow bandwidth-dominant operands to bf16; MXU accumulates in f32.
    x2 = x2.astype(jnp.bfloat16)
    w_bd = w_bd.astype(jnp.bfloat16)

    # Tile rows: enables double-buffered DMA pipelining and keeps VMEM small
    # (2 bufs * (TM*K bf16 + TM*N f32) << 16 MiB default scoped VMEM on v5e,
    # and well under v6e/v7x budgets).  TM multiple of 8; pad ragged M.
    TM = min(512, _round_up(M, 8))
    M_pad = _round_up(M, TM)
    if M_pad != M:
        x2 = jnp.pad(x2, ((0, M_pad - M), (0, 0)))

    out = pl.pallas_call(
        _recon_head_kernel,
        out_shape=jax.ShapeDtypeStruct((M_pad, N), hidden_features.dtype),
        grid_spec=pltpu.PrefetchScalarGridSpec(
            num_scalar_prefetch=0,
            grid=(M_pad // TM,),
            in_specs=[
                pl.BlockSpec((TM, K), lambda i: (i, 0)),
                pl.BlockSpec((K, N), lambda i: (0, 0)),   # weight resident in VMEM
                pl.BlockSpec((1, N), lambda i: (0, 0)),   # bias resident in VMEM
            ],
            out_specs=pl.BlockSpec((TM, N), lambda i: (i, 0)),
        ),
        compiler_params=pltpu.CompilerParams(
            # Rows are independent; lets v7x shard tiles across both TCs.
            dimension_semantics=("parallel",),
        ),
    )(x2, w_bd, b_tiled)

    out = out[:M]                          # drop row padding
    recon = out.reshape(B, C, N)           # == Flatten(start_dim=-2)
    recon = jnp.swapaxes(recon, -1, -2)    # (B, context_length, C)
    return recon


def _reference(hidden_features, weight, bias):
    # Pure-JAX reference of the PyTorch forward (eval mode).
    y = jnp.einsum("bcnd,pd->bcnp", hidden_features, weight) + bias
    B, C, NP, P = y.shape
    y = y.reshape(B, C, NP * P)
    return jnp.swapaxes(y, -1, -2)


if __name__ == "__main__":
    # Config-consistent small shapes:
    # context_length=64, patch_length=8, patch_stride=8 -> num_patches=8
    # decoder_d_model_layerwise[-1] = decoder_d_model = 16
    B, C, NP, D, P = 2, 4, 8, 16, 8

    key = jax.random.PRNGKey(0)
    k_x, k_w, k_b = jax.random.split(key, 3)
    hidden_features = jax.random.normal(k_x, (B, C, NP, D), dtype=jnp.float32)
    # Deterministic synthetic Linear(D -> P) parameters (PyTorch layout).
    weight = jax.random.normal(k_w, (P, D), dtype=jnp.float32) * 0.02
    bias = jax.random.normal(k_b, (P,), dtype=jnp.float32) * 0.02

    out = reconstruction_head(hidden_features, weight, bias)
    out = jax.block_until_ready(out)

    ref = _reference(hidden_features, weight, bias)
    assert out.shape == (B, NP * P, C), out.shape
    # bf16 operands (f32 accumulate) -> slightly looser tolerance than pure f32.
    err = float(jnp.max(jnp.abs(out - ref)))
    assert jnp.allclose(out, ref, atol=1e-2, rtol=1e-2), err

    print("KERNEL_OK")
</pallas_src>

<mosaic_0001>
module attributes {stable_mosaic.version = 11 : i64} {
  func.func @_recon_head_kernel(%arg0: i32, %arg1: memref<8x128xbf16, #tpu.memory_space<vmem>>, %arg2: memref<128x64xbf16, #tpu.memory_space<vmem>>, %arg3: memref<1x64xf32, #tpu.memory_space<vmem>>, %arg4: memref<8x64xf32, #tpu.memory_space<vmem>>) attributes {dimension_semantics = [#tpu.dimension_semantics<parallel>], iteration_bounds = array<i64: 1>, scalar_prefetch = 0 : i64, scratch_operands = 0 : i64, tpu.core_type = #tpu.core_type<tc>, window_params = [{transform_indices = @transform_0, window_bounds = array<i64: 8, 128>}, {pipeline_mode = #tpu.pipeline_mode<synchronous>, transform_indices = @transform_1, window_bounds = array<i64: 128, 64>}, {pipeline_mode = #tpu.pipeline_mode<synchronous>, transform_indices = @transform_2, window_bounds = array<i64: 1, 64>}, {transform_indices = @transform_3, window_bounds = array<i64: 8, 64>}]} {
    %c0 = arith.constant 0 : index
    %c0_0 = arith.constant 0 : index
    %0 = vector.load %arg1[%c0, %c0_0] : memref<8x128xbf16, #tpu.memory_space<vmem>>, vector<8x128xbf16>
    %c0_1 = arith.constant 0 : index
    %c0_2 = arith.constant 0 : index
    %1 = vector.load %arg2[%c0_1, %c0_2] : memref<128x64xbf16, #tpu.memory_space<vmem>>, vector<128x64xbf16>
    %cst = arith.constant dense<0.000000e+00> : vector<8x64xf32>
    %2 = tpu.matmul %0, %1, %cst {dimension_numbers = #tpu.dot_dimension_numbers<[1], [0], [0], [1], [0, 0, 1, 1], [], []>} : vector<8x128xbf16>, vector<128x64xbf16>, vector<8x64xf32> -> vector<8x64xf32>
    %c0_3 = arith.constant 0 : index
    %c0_4 = arith.constant 0 : index
    %3 = vector.load %arg3[%c0_3, %c0_4] : memref<1x64xf32, #tpu.memory_space<vmem>>, vector<1x64xf32>
    %4 = vector.broadcast %3 : vector<1x64xf32> to vector<8x64xf32>
    %5 = arith.addf %2, %4 : vector<8x64xf32>
    %c0_5 = arith.constant 0 : index
    %c0_6 = arith.constant 0 : index
    %6 = vector.load %arg4[%c0_5, %c0_6] : memref<8x64xf32, #tpu.memory_space<vmem>>, vector<8x64xf32>
    tpu.vector_store %arg4[%c0_5, %c0_6], %5 {strides = array<i32>} : memref<8x64xf32, #tpu.memory_space<vmem>>, vector<8x64xf32>,
    return
  }
  func.func @transform_0(%arg0: i32) -> (i32, i32) {
    %c0_i32 = arith.constant 0 : i32
    %c0_i32_0 = arith.constant 0 : i32
    return %arg0, %c0_i32 : i32, i32
  }
  func.func @transform_1(%arg0: i32) -> (i32, i32) {
    %c0_i32 = arith.constant 0 : i32
    %c0_i32_0 = arith.constant 0 : i32
    %c0_i32_1 = arith.constant 0 : i32
    return %c0_i32, %c0_i32_0 : i32, i32
  }
  func.func @transform_2(%arg0: i32) -> (i32, i32) {
    %c0_i32 = arith.constant 0 : i32
    %c0_i32_0 = arith.constant 0 : i32
    %c0_i32_1 = arith.constant 0 : i32
    return %c0_i32, %c0_i32_0 : i32, i32
  }
  func.func @transform_3(%arg0: i32) -> (i32, i32) {
    %c0_i32 = arith.constant 0 : i32
    %c0_i32_0 = arith.constant 0 : i32
    return %arg0, %c0_i32 : i32, i32
  }
}

</mosaic_0001>

<llo_original>
// kernel: tile.8
$region0: #{tile.8}
  #allocation0 [shape = 's32[1]{0}', space=sflag, size = 0x4, scoped, tag = 'scoped memory for tile.8']
  %s0 = inlined_call_operand.vmem [shape: f32[8], index: 0, kind: input, shape index: {}]
  %s1 = inlined_call_operand.vmem [shape: f32[8,8], index: 1, kind: output, shape index: {}]
  // Predicated region
  $region2: #{tile.8} parent=0 // pred_check
    _
  $region3: #{tile.8} parent=0 // pred_check_branch
    %3 = sbr.rel (0) target = $region5
  $region4: #{tile.8} parent=0 // pred_region
    _
  $region5: #{tile.8} parent=0 // pred_fallthru
    _
  %v4 = vld [vmem:[%s0] ss:$0 sm:$0xff]
  %5 = vst [vmem:[%s1] sm:$0xff] %v4

// kernel: tile.9
$region0: #{tile.9}
  %s0 = inlined_call_operand.vmem [shape: f32[8,8], index: 0, kind: input, shape index: {}]
  %s1 = inlined_call_operand.vmem [shape: f32[1,64], index: 1, kind: output, shape index: {}]
  $region1: #{tile.9} parent=0
    #allocation0 [shape = 'u8[4096]{0}', space=vmem, size = 0x1000, scoped, tag = 'scoped mem for output reshape']
    %v2 = vld [vmem:[%s0] sm:$0x1]
    %vm3 = vcmask 64512
    %4 = vst.msk [vmem:[#allocation0] sm:$0x1] %vm3, %v2
    %s5 = scalar_lea.vmem %s0, 7
    %v6 = vld [vmem:[%s5] sm:$0x1]
    %7 = vrot.lane.b32.xlu0 %v6, 56
    %v8 = vpop.permute.xlu0 %7
    %vm9 = vcmask 523712
    %10 = vst.msk [vmem:[#allocation0] sm:$0x1] %vm9, %v8
    %s11 = scalar_lea.vmem %s0, 6
    %v12 = vld [vmem:[%s11] sm:$0x1]
    %13 = vrot.lane.b32.xlu0 %v12, 48
    %v14 = vpop.permute.xlu0 %13
    %vm15 = vcmask 458112
    %16 = vst.msk [vmem:[#allocation0] sm:$0x1] %vm15, %v14
    %s17 = scalar_lea.vmem %s0, 5
    %v18 = vld [vmem:[%s17] sm:$0x1]
    %19 = vrot.lane.b32.xlu0 %v18, 40
    %v20 = vpop.permute.xlu0 %19
    %vm21 = vcmask 392512
    %22 = vst.msk [vmem:[#allocation0] sm:$0x1] %vm21, %v20
    %s23 = scalar_lea.vmem %s0, 4
    %v24 = vld [vmem:[%s23] sm:$0x1]
    %25 = vrot.lane.b32.xlu0 %v24, 32
    %v26 = vpop.permute.xlu0 %25
    %vm27 = vcmask 326912
    %28 = vst.msk [vmem:[#allocation0] sm:$0x1] %vm27, %v26
    %s29 = scalar_lea.vmem %s0, 3
    %v30 = vld [vmem:[%s29] sm:$0x1]
    %31 = vrot.lane.b32.xlu0 %v30, 24
    %v32 = vpop.permute.xlu0 %31
    %vm33 = vcmask 261312
    %34 = vst.msk [vmem:[#allocation0] sm:$0x1] %vm33, %v32
    %s35 = scalar_lea.vmem %s0, 2
    %v36 = vld [vmem:[%s35] sm:$0x1]
    %37 = vrot.lane.b32.xlu0 %v36, 16
    %v38 = vpop.permute.xlu0 %37
    %vm39 = vcmask 195712
    %40 = vst.msk [vmem:[#allocation0] sm:$0x1] %vm39, %v38
    %s41 = scalar_lea.vmem %s0, 1
    %v42 = vld [vmem:[%s41] sm:$0x1]
    %43 = vrot.lane.b32.xlu0 %v42, 8
    %v44 = vpop.permute.xlu0 %43
    %vm45 = vcmask 130112
    %46 = vst.msk [vmem:[#allocation0] sm:$0x1] %vm45, %v44
    %s48 = ssub.s32 2, 1
    %v49 = vld [vmem:[#allocation0] sm:%s48]
    %s51 = ssub.s32 2, 1
    %52 = vst [vmem:[%s1] sm:%s51] %v49

// kernel: reconstruction_head.1
$region0: #{reconstruction_head.1}
  #allocation0 [shape = 'u32[]', space=smem, size = 0x4, offset = 0x4, fixed_abs, tag = 'smem constant byte address 0x4 - core index']
  #allocation1 [shape = 'u32[72,128]{1,0:T(1,128)}', space=vmem, size = 0x9000, scoped, tag = 'internal scratch']
  %s0 = inlined_call_operand.vmem [shape: bf16[8,128], index: 0, kind: input, shape index: {}]
  %s1 = inlined_call_operand.vmem [shape: bf16[128,64], index: 1, kind: input, shape index: {}]
  %s2 = inlined_call_operand.vmem [shape: f32[1,64], index: 2, kind: input, shape index: {}]
  %s3 = inlined_call_operand.hbm [shape: f32[8,64], index: 3, kind: output, shape index: {}]
  %s4 = sld [smem:[#allocation0]]
  $region22: #{reconstruction_head.1} parent=0
    _
  %s6 = ssub.s32 1, %s4
  %s7 = scalar_select 0, %s6, %s4
  $region1: #{reconstruction_head.1} parent=0
    #allocation2 [shape = 'u8[4096]{0}', space=vmem, size = 0x1000, scoped, tag = 'output window, operand 0, single buffered']
    #allocation3 [shape = 's32[1]{0}', space=sflag, size = 0x4, scoped, tag = 'scoped memory for reconstruction_head.1']
    %8 = vsyncpa [#allocation3], 0
    // Predicated region
    $region2: #{reconstruction_head.1} parent=1 // pred_check
      _
    $region3: #{reconstruction_head.1} parent=1 // pred_check_branch
      %10 = sbr.rel (0) target = $region5
    $region4: #{reconstruction_head.1} parent=1 // pred_region
      _
    $region5: #{reconstruction_head.1} parent=1 // pred_fallthru
      _
    // Predicated region
    $region6: #{reconstruction_head.1} parent=1 // pred_check
      _
    $region7: #{reconstruction_head.1} parent=1 // pred_check_branch
      %12 = sbr.rel (0) target = $region9
    $region8: #{reconstruction_head.1} parent=1 // pred_region
      _
    $region9: #{reconstruction_head.1} parent=1 // pred_fallthru
      _
    // Predicated region
    $region10: #{reconstruction_head.1} parent=1 // pred_check
      _
    $region11: #{reconstruction_head.1} parent=1 // pred_check_branch
      %14 = sbr.rel (0) target = $region13
    $region12: #{reconstruction_head.1} parent=1 // pred_region
      _
    $region13: #{reconstruction_head.1} parent=1 // pred_fallthru
      _
    %v15 = vld [vmem:[%s0] sm:$0xf]
    %v16 = vld [vmem:[%s1] sm:$0xf]
    %v17 = vld [vmem:[%s1 + $0x4] sm:$0xf]
    %v18 = vld [vmem:[%s1 + $0x8] sm:$0xf]
    %v19 = vld [vmem:[%s1 + $0xc] sm:$0xf]
    %v20 = vld [vmem:[%s1 + $0x10] sm:$0xf]
    %v21 = vld [vmem:[%s1 + $0x14] sm:$0xf]
    %v22 = vld [vmem:[%s1 + $0x18] sm:$0xf]
    %v23 = vld [vmem:[%s1 + $0x1c] sm:$0xf]
    %v24 = vld [vmem:[%s1 + $0x20] sm:$0xf]
    %v25 = vld [vmem:[%s1 + $0x24] sm:$0xf]
    %v26 = vld [vmem:[%s1 + $0x28] sm:$0xf]
    %v27 = vld [vmem:[%s1 + $0x2c] sm:$0xf]
    %v28 = vld [vmem:[%s1 + $0x30] sm:$0xf]
    %v29 = vld [vmem:[%s1 + $0x34] sm:$0xf]
    %v30 = vld [vmem:[%s1 + $0x38] sm:$0xf]
    %v31 = vld [vmem:[%s1 + $0x3c] sm:$0xf]
    %v32 = vld [vmem:[%s2] sm:$0x1]
    %v34 = vperm.slane %v32, 0
    %v52 = vunpack.c.l.b16 %v16
    %v53 = vunpack.c.l.b16 %v17
    %v54 = vunpack.c.l.b16 %v18
    %v55 = vunpack.c.l.b16 %v19
    %v56 = vunpack.c.l.b16 %v20
    %v57 = vunpack.c.l.b16 %v21
    %v58 = vunpack.c.l.b16 %v22
    %v59 = vunpack.c.l.b16 %v23
    %v60 = vunpack.c.l.b16 %v24
    %v61 = vunpack.c.l.b16 %v25
    %v62 = vunpack.c.l.b16 %v26
    %v63 = vunpack.c.l.b16 %v27
    %v64 = vunpack.c.l.b16 %v28
    %v65 = vunpack.c.l.b16 %v29
    %v66 = vunpack.c.l.b16 %v30
    %v67 = vunpack.c.l.b16 %v31
    %v68 = vpack.c.b16 %v53, %v52
    %v69 = vpack.c.b16 %v55, %v54
    %v70 = vpack.c.b16 %v57, %v56
    %v71 = vpack.c.b16 %v59, %v58
    %v72 = vpack.c.b16 %v61, %v60
    %v73 = vpack.c.b16 %v63, %v62
    %v74 = vpack.c.b16 %v65, %v64
    %v75 = vpack.c.b16 %v67, %v66
    %84 = vmatpush.bf16.msra.mxu0 %v75
    %85 = vmatpush.bf16.msra.mxu0 %v74
    %86 = vmatpush.bf16.msra.mxu0 %v73
    %87 = vmatpush.bf16.msra.mxu0 %v72
    %88 = vmatpush.bf16.msra.mxu0 %v71
    %89 = vmatpush.bf16.msra.mxu0 %v70
    %90 = vmatpush.bf16.msra.mxu0 %v69
    %91 = vmatpush.bf16.msra.mxu0 %v68
    %92 = vmatmul.bf16.gmra.mxu0 %v15
    %v93 = vpop.f32.mrf.mxu0
    %v94 = vadd.f32 %v34, %v93
    %v95 = vpop.f32.mrf.mxu0
    %96 = vdwg.mxu0
    %vm97 = vcmask 523264
    %98 = vst.msk [vmem:[#allocation2] sm:$0xff] %vm97, %v94
    // Predicated region
    $region14: #{reconstruction_head.1} parent=1 // pred_check
      _
    $region15: #{reconstruction_head.1} parent=1 // pred_check_branch
      %100 = sbr.rel (0) target = $region17
    $region16: #{reconstruction_head.1} parent=1 // pred_region
      %102 = vsyncadd [#allocation3], 0
      %s104 = sshll.u32 [#allocation2], 4
      %s105 = int_to_ptr.vmem [resolvable:$true] %s104
      %s106 = sshll.u32 %s3, 4
      %s107 = int_to_ptr.hbm [resolvable:$true] %s106
      %109 = dma.vmem_to_hbm [thread:$0]  %s105, 128, %s107, [#allocation3]
    $region17: #{reconstruction_head.1} parent=1 // pred_fallthru
      _
    // Predicated region
    $region18: #{reconstruction_head.1} parent=1 // pred_check
      _
    $region19: #{reconstruction_head.1} parent=1 // pred_check_branch
      %111 = sbr.rel (0) target = $region21
    $region20: #{reconstruction_head.1} parent=1 // pred_region
      %113 = dma.done [#allocation3], 128
    $region21: #{reconstruction_head.1} parent=1 // pred_fallthru
      _
    %114 = vsyncpa [#allocation3], 1

</llo_original>
